<compile_context>
chip_gen: v6e
topology: v6e:2x2x1
jax: 0.10.0
libtpu: 0.0.40
codegen_flags: <defaults>
</compile_context>

<pallas_src>
import jax
import jax.numpy as jnp
from jax.experimental import pallas as pl
from jax.experimental.pallas import tpu as pltpu


def _cdiv(a, b):
    return -(-a // b)


def _round_up(a, m):
    return _cdiv(a, m) * m


# ----------------------------- kernels ------------------------------------ #
def _decoder_kernel_nb(x_ref, w1_ref, b1_ref, w2_ref, b2_ref, mean_ref, h_ref):
    # Hidden activation is shared across all out_dim tiles of this batch tile:
    # compute it once (at the first out-tile) into the VMEM scratch.
    # NOTE: correctness relies on grid axis 1 being the innermost sequential
    # ("arbitrary") axis so j==0 executes first for every batch tile i.
    @pl.when(pl.program_id(1) == 0)
    def _():
        h = jnp.dot(x_ref[...], w1_ref[...], preferred_element_type=jnp.float32)
        h_ref[...] = jnp.maximum(h + b1_ref[...], 0.0).astype(h_ref.dtype)

    z = jnp.dot(h_ref[...], w2_ref[...], preferred_element_type=jnp.float32)
    z = z + b2_ref[...]
    mean_ref[...] = jnp.logaddexp(z, 0.0).astype(mean_ref.dtype)   # stable softplus


def _decoder_kernel_zinb(x_ref, w1_ref, b1_ref, wcat_ref, bcat_ref,
                         mean_ref, drop_ref, h_ref):
    @pl.when(pl.program_id(1) == 0)
    def _():
        h = jnp.dot(x_ref[...], w1_ref[...], preferred_element_type=jnp.float32)
        h_ref[...] = jnp.maximum(h + b1_ref[...], 0.0).astype(h_ref.dtype)

    # One wider-N matmul over the concatenated [W2 | Wd] tile, then split at a
    # lane-aligned (multiple-of-128) boundary.
    z = jnp.dot(h_ref[...], wcat_ref[...], preferred_element_type=jnp.float32)
    z = z + bcat_ref[...]
    to = mean_ref.shape[1]
    mean_ref[...] = jnp.logaddexp(z[:, :to], 0.0).astype(mean_ref.dtype)
    drop_ref[...] = z[:, to:].astype(drop_ref.dtype)


# ----------------------------- wrapper ------------------------------------ #
def decoder_forward(x, params, recon_type='nb', *, tile_n=512, tile_out=2048,
                    use_bf16=True):
    """Fused 2-layer MLP decoder: relu hidden -> softplus head (+ dropout head)."""
    n, in_dim = x.shape
    hidden_dim = params['w1'].shape[1]
    out_dim = params['w2'].shape[1]
    heads = 2 if recon_type == 'zinb' else 1

    compute_dtype = jnp.bfloat16 if use_bf16 else jnp.float32
    out_dtype = x.dtype
    cbytes = 2 if use_bf16 else 4
    obytes = jnp.dtype(out_dtype).itemsize

    # --- padded feature dims -----------------------------------------------
    in_p = _round_up(in_dim, 128)
    hid_p = _round_up(hidden_dim, 128)
    out_full = _round_up(out_dim, 128)

    # Batch tile: balance against n to minimize padded rows; multiple of 16
    # (bf16 packs 16 rows/vreg, also a multiple of the f32 sublane count 8).
    n_tiles = max(1, _cdiv(n, tile_n))
    tn = _round_up(_cdiv(n, n_tiles), 16)
    n_p = n_tiles * tn

    # Conservative per-grid-step VMEM estimate (assume double buffering on all
    # pipelined operands, even grid-constant ones).
    def _vmem_est(to):
        e = 2 * tn * in_p * cbytes               # x tile
        e += 2 * in_p * hid_p * cbytes           # W1 (grid-constant)
        e += 2 * hid_p * 4                       # b1
        e += 2 * hid_p * heads * to * cbytes     # [W2|Wd] tile
        e += 2 * heads * to * 4                  # [b2|bd] tile
        e += heads * 2 * tn * to * obytes        # output tiles (f32)
        e += tn * hid_p * cbytes                 # h scratch
        return e

    budget = 40 * 1024 * 1024   # stays inside v7x's 64 MiB physical VMEM

    # Prefer fully-resident head weights (out axis collapses to one step:
    # W2/Wd DMA'd once per call).  Fall back to balanced out_dim tiling.
    if _vmem_est(out_full) <= budget:
        j_tiles, to = 1, out_full
    else:
        j_tiles = max(1, _cdiv(out_full, min(tile_out, out_full)))
        while True:
            to = _round_up(_cdiv(out_dim, j_tiles), 128)
            if _vmem_est(to) <= budget or to <= 256:
                break
            j_tiles += 1
    out_p = j_tiles * to

    vmem_limit = int(min(56 * 1024 * 1024,
                         max(16 * 1024 * 1024, _vmem_est(to) + 8 * 1024 * 1024)))

    # --- pad operands (zero padding is mathematically inert) ----------------
    xp = jnp.pad(x, ((0, n_p - n), (0, in_p - in_dim))).astype(compute_dtype)
    w1 = jnp.pad(params['w1'],
                 ((0, in_p - in_dim), (0, hid_p - hidden_dim))).astype(compute_dtype)
    b1 = jnp.pad(params['b1'].reshape(1, -1),
                 ((0, 0), (0, hid_p - hidden_dim))).astype(jnp.float32)

    def _pad_head(w, b):
        wp = jnp.pad(w, ((0, hid_p - hidden_dim),
                         (0, out_p - out_dim))).astype(compute_dtype)
        bp = jnp.pad(b.reshape(1, -1),
                     ((0, 0), (0, out_p - out_dim))).astype(jnp.float32)
        return wp, bp

    w2, b2 = _pad_head(params['w2'], params['b2'])

    grid = (n_tiles, j_tiles)   # (batch tiles [parallel], out_dim tiles [arbitrary])
    x_spec = pl.BlockSpec((tn, in_p), lambda i, j: (i, 0))
    w1_spec = pl.BlockSpec((in_p, hid_p), lambda i, j: (0, 0))
    b1_spec = pl.BlockSpec((1, hid_p), lambda i, j: (0, 0))
    whead_spec = pl.BlockSpec((hid_p, heads * to), lambda i, j: (0, j))
    bhead_spec = pl.BlockSpec((1, heads * to), lambda i, j: (0, j))
    out_spec = pl.BlockSpec((tn, to), lambda i, j: (i, j))

    cparams = pltpu.CompilerParams(
        # Axis 1 must stay "arbitrary": the h-scratch reuse needs j==0 to run
        # first for every i on each core.  Axis 0 "parallel" -> v7x megacore.
        dimension_semantics=("parallel", "arbitrary"),
        vmem_limit_bytes=vmem_limit,
    )
    scratch = [pltpu.VMEM((tn, hid_p), compute_dtype)]   # shared hidden activation

    if recon_type == 'zinb':
        wd, bd = _pad_head(params['wd'], params['bd'])
        # Interleave per out-tile so slab j of the concatenated operand is
        # [W2[:, j-th tile] | Wd[:, j-th tile]]  (each `to` lanes wide).
        wcat = jnp.concatenate(
            [w2.reshape(hid_p, j_tiles, 1, to), wd.reshape(hid_p, j_tiles, 1, to)],
            axis=2).reshape(hid_p, j_tiles * 2 * to)
        bcat = jnp.concatenate(
            [b2.reshape(1, j_tiles, 1, to), bd.reshape(1, j_tiles, 1, to)],
            axis=2).reshape(1, j_tiles * 2 * to)

        mean_p, drop_p = pl.pallas_call(
            _decoder_kernel_zinb,
            out_shape=(jax.ShapeDtypeStruct((n_p, out_p), out_dtype),
                       jax.ShapeDtypeStruct((n_p, out_p), out_dtype)),
            grid=grid,
            in_specs=[x_spec, w1_spec, b1_spec, whead_spec, bhead_spec],
            out_specs=(out_spec, out_spec),
            scratch_shapes=scratch,
            compiler_params=cparams,
        )(xp, w1, b1, wcat, bcat)
        return {'mean': mean_p[:n, :out_dim], 'dropout': drop_p[:n, :out_dim]}

    mean_p = pl.pallas_call(
        _decoder_kernel_nb,
        out_shape=jax.ShapeDtypeStruct((n_p, out_p), out_dtype),
        grid=grid,
        in_specs=[x_spec, w1_spec, b1_spec, whead_spec, bhead_spec],
        out_specs=out_spec,
        scratch_shapes=scratch,
        compiler_params=cparams,
    )(xp, w1, b1, w2, b2)
    return {'mean': mean_p[:n, :out_dim]}


# --------------------------- param init ------------------------------------ #
def init_decoder_params(key, in_dim, hidden_dim, out_dim, recon_type='nb'):
    """Deterministic init mimicking torch.nn.Linear (uniform(+-1/sqrt(fan_in)))."""
    def linear(key, fan_in, fan_out):
        kw, kb = jax.random.split(key)
        bound = 1.0 / jnp.sqrt(fan_in)
        w = jax.random.uniform(kw, (fan_in, fan_out), jnp.float32, -bound, bound)
        b = jax.random.uniform(kb, (fan_out,), jnp.float32, -bound, bound)
        return w, b

    k1, k2, k3 = jax.random.split(key, 3)
    w1, b1 = linear(k1, in_dim, hidden_dim)
    w2, b2 = linear(k2, hidden_dim, out_dim)
    params = {'w1': w1, 'b1': b1, 'w2': w2, 'b2': b2}
    if recon_type == 'zinb':
        wd, bd = linear(k3, hidden_dim, out_dim)
        params['wd'] = wd
        params['bd'] = bd
    return params


# ----------------------------- reference ---------------------------------- #
def decoder_reference(x, params, recon_type='nb'):
    hp = jax.lax.Precision.HIGHEST
    h = jnp.maximum(jnp.dot(x, params['w1'], precision=hp) + params['b1'], 0.0)
    mean = jnp.logaddexp(jnp.dot(h, params['w2'], precision=hp) + params['b2'], 0.0)
    out = {'mean': mean}
    if recon_type == 'zinb':
        out['dropout'] = jnp.dot(h, params['wd'], precision=hp) + params['bd']
    return out


# ------------------------------- main -------------------------------------- #
if __name__ == "__main__":
    key = jax.random.PRNGKey(0)
    kx, kp = jax.random.split(key)

    # Small shapes consistent with the module: latent -> hidden -> genes.
    # out_dim deliberately not a multiple of 128 to exercise the padding path.
    batch, in_dim, hidden_dim, out_dim = 16, 32, 64, 200

    x = jax.random.normal(kx, (batch, in_dim), dtype=jnp.float32)

    for recon_type in ('nb', 'zinb'):
        params = init_decoder_params(kp, in_dim, hidden_dim, out_dim, recon_type)
        ref = decoder_reference(x, params, recon_type)

        # f32 path: must match the reference tightly.
        out_f32 = decoder_forward(x, params, recon_type, use_bf16=False)
        jax.block_until_ready(out_f32)
        for k in ref:
            assert bool(jnp.allclose(out_f32[k], ref[k], atol=1e-3, rtol=1e-3)), \
                f"f32 mismatch in '{k}' ({recon_type})"

        # Default bf16-MXU path (f32 accumulation + f32 epilogue): looser tol.
        out_bf16 = decoder_forward(x, params, recon_type)
        jax.block_until_ready(out_bf16)
        for k in ref:
            assert bool(jnp.allclose(out_bf16[k], ref[k], atol=1e-1, rtol=1e-1)), \
                f"bf16 mismatch in '{k}' ({recon_type})"

    print("KERNEL_OK")
</pallas_src>

<mosaic_0001>
module attributes {stable_mosaic.version = 11 : i64} {
  func.func @_decoder_kernel_nb(%arg0: i32, %arg1: i32, %arg2: memref<16x128xf32, #tpu.memory_space<vmem>>, %arg3: memref<128x128xf32, #tpu.memory_space<vmem>>, %arg4: memref<1x128xf32, #tpu.memory_space<vmem>>, %arg5: memref<128x256xf32, #tpu.memory_space<vmem>>, %arg6: memref<1x256xf32, #tpu.memory_space<vmem>>, %arg7: memref<16x256xf32, #tpu.memory_space<vmem>>, %arg8: memref<16x128xf32, #tpu.memory_space<vmem>>) attributes {dimension_semantics = [#tpu.dimension_semantics<parallel>, #tpu.dimension_semantics<arbitrary>], iteration_bounds = array<i64: 1, 1>, scalar_prefetch = 0 : i64, scratch_operands = 1 : i64, tpu.core_type = #tpu.core_type<tc>, window_params = [{transform_indices = @transform_0, window_bounds = array<i64: 16, 128>}, {pipeline_mode = #tpu.pipeline_mode<synchronous>, transform_indices = @transform_1, window_bounds = array<i64: 128, 128>}, {pipeline_mode = #tpu.pipeline_mode<synchronous>, transform_indices = @transform_2, window_bounds = array<i64: 1, 128>}, {transform_indices = @transform_3, window_bounds = array<i64: 128, 256>}, {transform_indices = @transform_4, window_bounds = array<i64: 1, 256>}, {transform_indices = @transform_5, window_bounds = array<i64: 16, 256>}]} {
    %c0_i32 = arith.constant 0 : i32
    %0 = arith.cmpi eq, %arg1, %c0_i32 : i32
    %1 = arith.extui %0 : i1 to i32
    %c0_i32_0 = arith.constant 0 : i32
    %2 = arith.cmpi ne, %1, %c0_i32_0 : i32
    scf.if %2 {
      %c0_10 = arith.constant 0 : index
      %c0_11 = arith.constant 0 : index
      %24 = vector.load %arg2[%c0_10, %c0_11] : memref<16x128xf32, #tpu.memory_space<vmem>>, vector<16x128xf32>
      %c0_12 = arith.constant 0 : index
      %c0_13 = arith.constant 0 : index
      %25 = vector.load %arg3[%c0_12, %c0_13] : memref<128x128xf32, #tpu.memory_space<vmem>>, vector<128x128xf32>
      %cst_14 = arith.constant dense<0.000000e+00> : vector<16x128xf32>
      %26 = tpu.matmul %24, %25, %cst_14 {dimension_numbers = #tpu.dot_dimension_numbers<[1], [0], [0], [1], [0, 0, 1, 1], [], []>} : vector<16x128xf32>, vector<128x128xf32>, vector<16x128xf32> -> vector<16x128xf32>
      %c0_15 = arith.constant 0 : index
      %c0_16 = arith.constant 0 : index
      %27 = vector.load %arg4[%c0_15, %c0_16] : memref<1x128xf32, #tpu.memory_space<vmem>>, vector<1x128xf32>
      %28 = vector.broadcast %27 : vector<1x128xf32> to vector<16x128xf32>
      %29 = arith.addf %26, %28 : vector<16x128xf32>
      %cst_17 = arith.constant 0.000000e+00 : f32
      %30 = vector.broadcast %cst_17 : f32 to vector<16x128xf32>
      %31 = arith.maximumf %29, %30 : vector<16x128xf32>
      %c0_18 = arith.constant 0 : index
      %c0_19 = arith.constant 0 : index
      %32 = vector.load %arg8[%c0_18, %c0_19] : memref<16x128xf32, #tpu.memory_space<vmem>>, vector<16x128xf32>
      tpu.vector_store %arg8[%c0_18, %c0_19], %31 {strides = array<i32>} : memref<16x128xf32, #tpu.memory_space<vmem>>, vector<16x128xf32>,
    } else {
    }
    %c0 = arith.constant 0 : index
    %c0_1 = arith.constant 0 : index
    %3 = vector.load %arg8[%c0, %c0_1] : memref<16x128xf32, #tpu.memory_space<vmem>>, vector<16x128xf32>
    %c0_2 = arith.constant 0 : index
    %c0_3 = arith.constant 0 : index
    %4 = vector.load %arg5[%c0_2, %c0_3] : memref<128x256xf32, #tpu.memory_space<vmem>>, vector<128x256xf32>
    %cst = arith.constant dense<0.000000e+00> : vector<16x256xf32>
    %5 = tpu.matmul %3, %4, %cst {dimension_numbers = #tpu.dot_dimension_numbers<[1], [0], [0], [1], [0, 0, 1, 1], [], []>} : vector<16x128xf32>, vector<128x256xf32>, vector<16x256xf32> -> vector<16x256xf32>
    %c0_4 = arith.constant 0 : index
    %c0_5 = arith.constant 0 : index
    %6 = vector.load %arg6[%c0_4, %c0_5] : memref<1x256xf32, #tpu.memory_space<vmem>>, vector<1x256xf32>
    %7 = vector.broadcast %6 : vector<1x256xf32> to vector<16x256xf32>
    %8 = arith.addf %5, %7 : vector<16x256xf32>
    %cst_6 = arith.constant 0.000000e+00 : f32
    %9 = vector.broadcast %cst_6 : f32 to vector<16x256xf32>
    %10 = arith.maximumf %8, %9 : vector<16x256xf32>
    %11 = vector.broadcast %cst_6 : f32 to vector<16x256xf32>
    %12 = arith.subf %8, %11 : vector<16x256xf32>
    %13 = arith.cmpf one, %12, %12 : vector<16x256xf32>
    %14 = vector.broadcast %cst_6 : f32 to vector<16x256xf32>
    %15 = arith.addf %8, %14 : vector<16x256xf32>
    %16 = math.absf %12 : vector<16x256xf32>
    %cst_7 = arith.constant 0.000000e+00 : f32
    %17 = vector.broadcast %cst_7 : f32 to vector<16x256xf32>
    %18 = arith.subf %17, %16 : vector<16x256xf32>
    %19 = math.exp %18 : vector<16x256xf32>
    %20 = math.log1p %19 : vector<16x256xf32>
    %21 = arith.addf %10, %20 : vector<16x256xf32>
    %22 = arith.select %13, %15, %21 : vector<16x256xi1>, vector<16x256xf32>
    %c0_8 = arith.constant 0 : index
    %c0_9 = arith.constant 0 : index
    %23 = vector.load %arg7[%c0_8, %c0_9] : memref<16x256xf32, #tpu.memory_space<vmem>>, vector<16x256xf32>
    tpu.vector_store %arg7[%c0_8, %c0_9], %22 {strides = array<i32>} : memref<16x256xf32, #tpu.memory_space<vmem>>, vector<16x256xf32>,
    return
  }
  func.func @transform_0(%arg0: i32, %arg1: i32) -> (i32, i32) {
    %c0_i32 = arith.constant 0 : i32
    %c0_i32_0 = arith.constant 0 : i32
    return %arg0, %c0_i32 : i32, i32
  }
  func.func @transform_1(%arg0: i32, %arg1: i32) -> (i32, i32) {
    %c0_i32 = arith.constant 0 : i32
    %c0_i32_0 = arith.constant 0 : i32
    %c0_i32_1 = arith.constant 0 : i32
    return %c0_i32, %c0_i32_0 : i32, i32
  }
  func.func @transform_2(%arg0: i32, %arg1: i32) -> (i32, i32) {
    %c0_i32 = arith.constant 0 : i32
    %c0_i32_0 = arith.constant 0 : i32
    %c0_i32_1 = arith.constant 0 : i32
    return %c0_i32, %c0_i32_0 : i32, i32
  }
  func.func @transform_3(%arg0: i32, %arg1: i32) -> (i32, i32) {
    %c0_i32 = arith.constant 0 : i32
    %c0_i32_0 = arith.constant 0 : i32
    return %c0_i32, %arg1 : i32, i32
  }
  func.func @transform_4(%arg0: i32, %arg1: i32) -> (i32, i32) {
    %c0_i32 = arith.constant 0 : i32
    %c0_i32_0 = arith.constant 0 : i32
    return %c0_i32, %arg1 : i32, i32
  }
  func.func @transform_5(%arg0: i32, %arg1: i32) -> (i32, i32) {
    %c0_i32 = arith.constant 0 : i32
    return %arg0, %arg1 : i32, i32
  }
}

</mosaic_0001>

<llo_original>
// kernel: tpu_custom_call.1
$region0: #{tpu_custom_call.1}
  #allocation0 [shape = 'u32[]', space=smem, size = 0x4, offset = 0x4, fixed_abs, tag = 'smem constant byte address 0x4 - core index']
  #allocation1 [shape = 'u32[144,128]{1,0:T(1,128)}', space=vmem, size = 0x12000, scoped, tag = 'internal scratch']
  #allocation2 [shape = 'f32[16,128]{1,0:T(8,128)}', space=vmem, size = 0x2000, scoped, tag = 'scratch operand']
  %s0 = inlined_call_operand.hbm [shape: f32[16,128], index: 0, kind: input, shape index: {}]
  %s1 = inlined_call_operand.hbm [shape: f32[128,128], index: 1, kind: input, shape index: {}]
  %s2 = inlined_call_operand.vmem [shape: f32[1,128], index: 2, kind: input, shape index: {}]
  %s3 = inlined_call_operand.hbm [shape: f32[128,256], index: 3, kind: input, shape index: {}]
  %s4 = inlined_call_operand.vmem [shape: f32[1,256], index: 4, kind: input, shape index: {}]
  %s5 = inlined_call_operand.hbm [shape: f32[16,256], index: 5, kind: output, shape index: {}]
  %s6 = sld [smem:[#allocation0]]
  $region46: #{tpu_custom_call.1} parent=0
    _
  %s8 = ssub.s32 1, %s6
  %s9 = scalar_select 0, %s8, %s6
  $region1: #{tpu_custom_call.1} parent=0
    #allocation3 [shape = 'u8[8192]{0}', space=vmem, size = 0x2000, scoped, tag = 'input window, operand 0, single buffered']
    #allocation4 [shape = 's32[1]{0}', space=sflag, size = 0x4, scoped, tag = 'scoped memory for tpu_custom_call.1']
    #allocation5 [shape = 's32[1]{0}', space=sflag, size = 0x4, scoped, tag = 'scoped memory for tpu_custom_call.1']
    #allocation6 [shape = 'u8[65536]{0}', space=vmem, size = 0x10000, scoped, tag = 'input window, operand 1, single buffered']
    #allocation7 [shape = 's32[1]{0}', space=sflag, size = 0x4, scoped, tag = 'scoped memory for tpu_custom_call.1']
    #allocation8 [shape = 'u8[131072]{0}', space=vmem, size = 0x20000, scoped, tag = 'input window, operand 3, single buffered']
    #allocation9 [shape = 'u8[16384]{0}', space=vmem, size = 0x4000, scoped, tag = 'output window, operand 0, single buffered']
    %10 = vsyncpa [#allocation4], 0
    %11 = vsyncpa [#allocation7], 0
    %12 = vsyncpa [#allocation5], 0
    // Predicated region
    $region2: #{tpu_custom_call.1} parent=1 // pred_check
      _
    $region3: #{tpu_custom_call.1} parent=1 // pred_check_branch
      %14 = sbr.rel (0) target = $region5
    $region4: #{tpu_custom_call.1} parent=1 // pred_region
      %s16 = ssub.s32 256, 256
      %17 = vsyncadd [#allocation4], %s16
      %s18 = sshll.u32 [#allocation3], 4
      %s19 = int_to_ptr.vmem [resolvable:$true] %s18
      %24 = dma.hbm_to_vmem [thread:$0]  %s0, 256, %s19, [#allocation4], 128, 128, 8
    $region5: #{tpu_custom_call.1} parent=1 // pred_fallthru
      _
    // Predicated region
    $region6: #{tpu_custom_call.1} parent=1 // pred_check
      _
    $region7: #{tpu_custom_call.1} parent=1 // pred_check_branch
      %26 = sbr.rel (0) target = $region9
    $region8: #{tpu_custom_call.1} parent=1 // pred_region
      %s28 = ssub.s32 2048, 2048
      %29 = vsyncadd [#allocation7], %s28
      %s30 = sshll.u32 [#allocation6], 4
      %s31 = int_to_ptr.vmem [resolvable:$true] %s30
      %36 = dma.hbm_to_vmem [thread:$0]  %s1, 2048, %s31, [#allocation7], 128, 128, 8
    $region9: #{tpu_custom_call.1} parent=1 // pred_fallthru
      _
    // Predicated region
    $region10: #{tpu_custom_call.1} parent=1 // pred_check
      _
    $region11: #{tpu_custom_call.1} parent=1 // pred_check_branch
      %38 = sbr.rel (0) target = $region13
    $region12: #{tpu_custom_call.1} parent=1 // pred_region
      _
    $region13: #{tpu_custom_call.1} parent=1 // pred_fallthru
      _
    // Predicated region
    $region14: #{tpu_custom_call.1} parent=1 // pred_check
      _
    $region15: #{tpu_custom_call.1} parent=1 // pred_check_branch
      %40 = sbr.rel (0) target = $region17
    $region16: #{tpu_custom_call.1} parent=1 // pred_region
      %s42 = ssub.s32 4096, 4096
      %43 = vsyncadd [#allocation7], %s42
      %s44 = sshll.u32 [#allocation8], 4
      %s45 = int_to_ptr.vmem [resolvable:$true] %s44
      %50 = dma.hbm_to_vmem [thread:$0]  %s3, 4096, %s45, [#allocation7], 256, 256, 16
    $region17: #{tpu_custom_call.1} parent=1 // pred_fallthru
      _
    // Predicated region
    $region18: #{tpu_custom_call.1} parent=1 // pred_check
      _
    $region19: #{tpu_custom_call.1} parent=1 // pred_check_branch
      %52 = sbr.rel (0) target = $region21
    $region20: #{tpu_custom_call.1} parent=1 // pred_region
      _
    $region21: #{tpu_custom_call.1} parent=1 // pred_fallthru
      _
    // Predicated region
    $region22: #{tpu_custom_call.1} parent=1 // pred_check
      _
    $region23: #{tpu_custom_call.1} parent=1 // pred_check_branch
      %54 = sbr.rel (0) target = $region25
    $region24: #{tpu_custom_call.1} parent=1 // pred_region
      %55 = dma.done [#allocation4], 256
    $region25: #{tpu_custom_call.1} parent=1 // pred_fallthru
      _
    // Predicated region
    $region26: #{tpu_custom_call.1} parent=1 // pred_check
      _
    $region27: #{tpu_custom_call.1} parent=1 // pred_check_branch
      %57 = sbr.rel (0) target = $region29
    $region28: #{tpu_custom_call.1} parent=1 // pred_region
      %58 = dma.done [#allocation7], 2048
    $region29: #{tpu_custom_call.1} parent=1 // pred_fallthru
      _
    // Predicated region
    $region30: #{tpu_custom_call.1} parent=1 // pred_check
      _
    $region31: #{tpu_custom_call.1} parent=1 // pred_check_branch
      %60 = sbr.rel (0) target = $region33
    $region32: #{tpu_custom_call.1} parent=1 // pred_region
      %61 = dma.done [#allocation7], 4096
    $region33: #{tpu_custom_call.1} parent=1 // pred_fallthru
      _
    %p62 = scmp.eq.s32.totalorder 0, 0
    // Predicated region
    $region34: #{tpu_custom_call.1} parent=1 // pred_check
      %p63 = pneg %p62
    $region35: #{tpu_custom_call.1} parent=1 // pred_check_branch
      %65 = sbr.rel (%p63) target = $region37
    $region36: #{tpu_custom_call.1} parent=1 // pred_region
      %v66 = vld [vmem:[#allocation3] sm:$0xff]
      %v67 = vld [vmem:[#allocation3 + $0x8] sm:$0xff]
      %v68 = vld [vmem:[#allocation6] sm:$0xff]
      %v69 = vld [vmem:[#allocation6 + $0x8] sm:$0xff]
      %v70 = vld [vmem:[#allocation6 + $0x10] sm:$0xff]
      %v71 = vld [vmem:[#allocation6 + $0x18] sm:$0xff]
      %v72 = vld [vmem:[#allocation6 + $0x20] sm:$0xff]
      %v73 = vld [vmem:[#allocation6 + $0x28] sm:$0xff]
      %v74 = vld [vmem:[#allocation6 + $0x30] sm:$0xff]
      %v75 = vld [vmem:[#allocation6 + $0x38] sm:$0xff]
      %v76 = vld [vmem:[#allocation6 + $0x40] sm:$0xff]
      %v77 = vld [vmem:[#allocation6 + $0x48] sm:$0xff]
      %v78 = vld [vmem:[#allocation6 + $0x50] sm:$0xff]
      %v79 = vld [vmem:[#allocation6 + $0x58] sm:$0xff]
      %v80 = vld [vmem:[#allocation6 + $0x60] sm:$0xff]
      %v81 = vld [vmem:[#allocation6 + $0x68] sm:$0xff]
      %v82 = vld [vmem:[#allocation6 + $0x70] sm:$0xff]
      %v83 = vld [vmem:[#allocation6 + $0x78] sm:$0xff]
      %v84 = vld [vmem:[%s2] sm:$0x1]
      %v86 = vlaneseq
      %v87 = vshrl.u32 %v86, 7
      %v88 = vsub.s32 0, %v87
      %v89 = vrot.slane %v84, %v88
      %91 = vmatprep.subr.mxu0 0.0
      %92 = vmatpush1.msra.mxu0 %v83
      %93 = vmatprep.subr.mxu0 0.0
      %94 = vmatpush1.msra.mxu0 %v82
      %95 = vmatprep.subr.mxu0 0.0
      %96 = vmatpush1.msra.mxu0 %v81
      %97 = vmatprep.subr.mxu0 0.0
      %98 = vmatpush1.msra.mxu0 %v80
      %99 = vmatprep.subr.mxu0 0.0
      %100 = vmatpush1.msra.mxu0 %v79
      %101 = vmatprep.subr.mxu0 0.0
      %102 = vmatpush1.msra.mxu0 %v78
      %103 = vmatprep.subr.mxu0 0.0
      %104 = vmatpush1.msra.mxu0 %v77
      %105 = vmatprep.subr.mxu0 0.0
      %106 = vmatpush1.msra.mxu0 %v76
      %107 = vmatprep.subr.mxu0 0.0
      %108 = vmatpush1.msra.mxu0 %v75
      %109 = vmatprep.subr.mxu0 0.0
      %110 = vmatpush1.msra.mxu0 %v74
      %111 = vmatprep.subr.mxu0 0.0
      %112 = vmatpush1.msra.mxu0 %v73
      %113 = vmatprep.subr.mxu0 0.0
      %114 = vmatpush1.msra.mxu0 %v72
      %115 = vmatprep.subr.mxu0 0.0
      %116 = vmatpush1.msra.mxu0 %v71
      %117 = vmatprep.subr.mxu0 0.0
      %118 = vmatpush1.msra.mxu0 %v70
      %119 = vmatprep.subr.mxu0 0.0
      %120 = vmatpush1.msra.mxu0 %v69
      %121 = vmatprep.subr.mxu0 0.0
      %122 = vmatpush1.msra.mxu0 %v68
      %123 = vmatprep.subr.mxu0 0.0
      %124 = vmatpush2.msra.mxu0 0.0
      %125 = vmatprep.subr.mxu0 0.0
      %126 = vmatpush2.msra.mxu0 0.0
      %127 = vmatprep.subr.mxu0 0.0
      %128 = vmatpush2.msra.mxu0 0.0
      %129 = vmatprep.subr.mxu0 0.0
      %130 = vmatpush2.msra.mxu0 0.0
      %131 = vmatprep.subr.mxu0 0.0
      %132 = vmatpush2.msra.mxu0 0.0
      %133 = vmatprep.subr.mxu0 0.0
      %134 = vmatpush2.msra.mxu0 0.0
      %135 = vmatprep.subr.mxu0 0.0
      %136 = vmatpush2.msra.mxu0 0.0
      %137 = vmatprep.subr.mxu0 0.0
      %138 = vmatpush2.msra.mxu0 0.0
      %139 = vmatprep.subr.mxu0 0.0
      %140 = vmatpush2.msra.mxu0 0.0
      %141 = vmatprep.subr.mxu0 0.0
      %142 = vmatpush2.msra.mxu0 0.0
      %143 = vmatprep.subr.mxu0 0.0
      %144 = vmatpush2.msra.mxu0 0.0
      %145 = vmatprep.subr.mxu0 0.0
      %146 = vmatpush2.msra.mxu0 0.0
      %147 = vmatprep.subr.mxu0 0.0
      %148 = vmatpush2.msra.mxu0 0.0
      %149 = vmatprep.subr.mxu0 0.0
      %150 = vmatpush2.msra.mxu0 0.0
      %151 = vmatprep.subr.mxu0 0.0
      %152 = vmatpush2.msra.mxu0 0.0
      %153 = vmatprep.subr.mxu0 0.0
      %154 = vmatpush2.msra.mxu0 0.0
      %155 = vmatprep.mubr.f32.mxu0 0.0
      %156 = vmatmul.mubr.f32.gmra.mxu0 %v66
      %v157 = vpop.f32.mrf.mxu0
      %v158 = vadd.f32 %v89, %v157
      %v159 = vpop.f32.mrf.mxu0
      %160 = vmatprep.mubr.f32.mxu0 0.0
      %161 = vmatmul.mubr.f32.gmra.mxu0 %v67
      %v162 = vpop.f32.mrf.mxu0
      %v163 = vadd.f32 %v89, %v162
      %v164 = vpop.f32.mrf.mxu0
      %165 = vdwg.mxu0
      %v166 = vmax.f32 %v158, 0.0
      %v167 = vmax.f32 %v163, 0.0
      %168 = vst [vmem:[#allocation2] sm:$0xff] %v166
      %169 = vst [vmem:[#allocation2 + $0x8] sm:$0xff] %v167
    $region37: #{tpu_custom_call.1} parent=1 // pred_fallthru
      _
    %v170 = vld [vmem:[#allocation2] sm:$0xff]
    %v171 = vld [vmem:[#allocation2 + $0x8] sm:$0xff]
    %v172 = vld [vmem:[#allocation8] sm:$0xff]
    %v173 = vld [vmem:[#allocation8 + $0x8] sm:$0xff]
    %v174 = vld [vmem:[#allocation8 + $0x10] sm:$0xff]
    %v175 = vld [vmem:[#allocation8 + $0x18] sm:$0xff]
    %v176 = vld [vmem:[#allocation8 + $0x20] sm:$0xff]
    %v177 = vld [vmem:[#allocation8 + $0x28] sm:$0xff]
    %v178 = vld [vmem:[#allocation8 + $0x30] sm:$0xff]
    %v179 = vld [vmem:[#allocation8 + $0x38] sm:$0xff]
    %v180 = vld [vmem:[#allocation8 + $0x40] sm:$0xff]
    %v181 = vld [vmem:[#allocation8 + $0x48] sm:$0xff]
    %v182 = vld [vmem:[#allocation8 + $0x50] sm:$0xff]
    %v183 = vld [vmem:[#allocation8 + $0x58] sm:$0xff]
    %v184 = vld [vmem:[#allocation8 + $0x60] sm:$0xff]
    %v185 = vld [vmem:[#allocation8 + $0x68] sm:$0xff]
    %v186 = vld [vmem:[#allocation8 + $0x70] sm:$0xff]
    %v187 = vld [vmem:[#allocation8 + $0x78] sm:$0xff]
    %v188 = vld [vmem:[#allocation8 + $0x80] sm:$0xff]
    %v189 = vld [vmem:[#allocation8 + $0x88] sm:$0xff]
    %v190 = vld [vmem:[#allocation8 + $0x90] sm:$0xff]
    %v191 = vld [vmem:[#allocation8 + $0x98] sm:$0xff]
    %v192 = vld [vmem:[#allocation8 + $0xa0] sm:$0xff]
    %v193 = vld [vmem:[#allocation8 + $0xa8] sm:$0xff]
    %v194 = vld [vmem:[#allocation8 + $0xb0] sm:$0xff]
    %v195 = vld [vmem:[#allocation8 + $0xb8] sm:$0xff]
    %v196 = vld [vmem:[#allocation8 + $0xc0] sm:$0xff]
    %v197 = vld [vmem:[#allocation8 + $0xc8] sm:$0xff]
    %v198 = vld [vmem:[#allocation8 + $0xd0] sm:$0xff]
    %v199 = vld [vmem:[#allocation8 + $0xd8] sm:$0xff]
    %v200 = vld [vmem:[#allocation8 + $0xe0] sm:$0xff]
    %v201 = vld [vmem:[#allocation8 + $0xe8] sm:$0xff]
    %v202 = vld [vmem:[#allocation8 + $0xf0] sm:$0xff]
    %v203 = vld [vmem:[#allocation8 + $0xf8] sm:$0xff]
    %v204 = vld [vmem:[%s4] sm:$0x3]
    %v206 = vlaneseq
    %v207 = vshrl.u32 %v206, 7
    %v208 = vsub.s32 0, %v207
    %v209 = vrot.slane %v204, %v208
    %v210 = vlaneseq
    %v211 = vshrl.u32 %v210, 7
    %v212 = vsub.s32 1, %v211
    %v213 = vrot.slane %v204, %v212
    %216 = vmatprep.subr.mxu0 %v203
    %217 = vmatpush1.msra.mxu0 %v202
    %218 = vmatprep.subr.mxu0 %v201
    %219 = vmatpush1.msra.mxu0 %v200
    %220 = vmatprep.subr.mxu0 %v199
    %221 = vmatpush1.msra.mxu0 %v198
    %222 = vmatprep.subr.mxu0 %v197
    %223 = vmatpush1.msra.mxu0 %v196
    %224 = vmatprep.subr.mxu0 %v195
    %225 = vmatpush1.msra.mxu0 %v194
    %226 = vmatprep.subr.mxu0 %v193
    %227 = vmatpush1.msra.mxu0 %v192
    %228 = vmatprep.subr.mxu0 %v191
    %229 = vmatpush1.msra.mxu0 %v190
    %230 = vmatprep.subr.mxu0 %v189
    %231 = vmatpush1.msra.mxu0 %v188
    %232 = vmatprep.subr.mxu0 %v187
    %233 = vmatpush1.msra.mxu0 %v186
    %234 = vmatprep.subr.mxu0 %v185
    %235 = vmatpush1.msra.mxu0 %v184
    %236 = vmatprep.subr.mxu0 %v183
    %237 = vmatpush1.msra.mxu0 %v182
    %238 = vmatprep.subr.mxu0 %v181
    %239 = vmatpush1.msra.mxu0 %v180
    %240 = vmatprep.subr.mxu0 %v179
    %241 = vmatpush1.msra.mxu0 %v178
    %242 = vmatprep.subr.mxu0 %v177
    %243 = vmatpush1.msra.mxu0 %v176
    %244 = vmatprep.subr.mxu0 %v175
    %245 = vmatpush1.msra.mxu0 %v174
    %246 = vmatprep.subr.mxu0 %v173
    %247 = vmatpush1.msra.mxu0 %v172
    %248 = vmatprep.subr.mxu0 0.0
    %249 = vmatpush2.msra.mxu0 0.0
    %250 = vmatprep.subr.mxu0 0.0
    %251 = vmatpush2.msra.mxu0 0.0
    %252 = vmatprep.subr.mxu0 0.0
    %253 = vmatpush2.msra.mxu0 0.0
    %254 = vmatprep.subr.mxu0 0.0
    %255 = vmatpush2.msra.mxu0 0.0
    %256 = vmatprep.subr.mxu0 0.0
    %257 = vmatpush2.msra.mxu0 0.0
    %258 = vmatprep.subr.mxu0 0.0
    %259 = vmatpush2.msra.mxu0 0.0
    %260 = vmatprep.subr.mxu0 0.0
    %261 = vmatpush2.msra.mxu0 0.0
    %262 = vmatprep.subr.mxu0 0.0
    %263 = vmatpush2.msra.mxu0 0.0
    %264 = vmatprep.subr.mxu0 0.0
    %265 = vmatpush2.msra.mxu0 0.0
    %266 = vmatprep.subr.mxu0 0.0
    %267 = vmatpush2.msra.mxu0 0.0
    %268 = vmatprep.subr.mxu0 0.0
    %269 = vmatpush2.msra.mxu0 0.0
    %270 = vmatprep.subr.mxu0 0.0
    %271 = vmatpush2.msra.mxu0 0.0
    %272 = vmatprep.subr.mxu0 0.0
    %273 = vmatpush2.msra.mxu0 0.0
    %274 = vmatprep.subr.mxu0 0.0
    %275 = vmatpush2.msra.mxu0 0.0
    %276 = vmatprep.subr.mxu0 0.0
    %277 = vmatpush2.msra.mxu0 0.0
    %278 = vmatprep.subr.mxu0 0.0
    %279 = vmatpush2.msra.mxu0 0.0
    %280 = vmatprep.mubr.f32.mxu0 0.0
    %281 = vmatmul.mubr.f32.gmra.mxu0 %v170
    %v282 = vpop.f32.mrf.mxu0
    %v283 = vadd.f32 %v209, %v282
    %v284 = vpop.f32.mrf.mxu0
    %v285 = vadd.f32 %v213, %v284
    %286 = vmatprep.mubr.f32.mxu0 0.0
    %287 = vmatmul.mubr.f32.gmra.mxu0 %v171
    %v288 = vpop.f32.mrf.mxu0
    %v289 = vadd.f32 %v209, %v288
    %v290 = vpop.f32.mrf.mxu0
    %v291 = vadd.f32 %v213, %v290
    %292 = vdwg.mxu0
    %v293 = vmax.f32 %v283, 0.0
    %v294 = vmax.f32 %v285, 0.0
    %v295 = vmax.f32 %v289, 0.0
    %v296 = vmax.f32 %v291, 0.0
    %vm297 = vcmp.ne.f32.partialorder %v283, %v283
    %vm298 = vcmp.ne.f32.partialorder %v285, %v285
    %vm299 = vcmp.ne.f32.partialorder %v289, %v289
    %vm300 = vcmp.ne.f32.partialorder %v291, %v291
    %v301 = vadd.f32 %v283, 0.0
    %v302 = vadd.f32 %v285, 0.0
    %v303 = vadd.f32 %v289, 0.0
    %v304 = vadd.f32 %v291, 0.0
    %v305 = vand.u32 2147483647, %v283
    %v306 = vand.u32 2147483647, %v285
    %v307 = vand.u32 2147483647, %v289
    %v308 = vand.u32 2147483647, %v291
    %v309 = vsub.f32 0.0, %v305
    %v310 = vsub.f32 0.0, %v306
    %v311 = vsub.f32 0.0, %v307
    %v312 = vsub.f32 0.0, %v308
    %v313 = vmul.f32 %v309, 1.442695
    %v314 = vpow.pop %v313
    %v315 = vmul.f32 %v310, 1.442695
    %v316 = vpow.pop %v315
    %v317 = vmul.f32 %v311, 1.442695
    %v318 = vpow.pop %v317
    %v319 = vmul.f32 %v312, 1.442695
    %v320 = vpow.pop %v319
    %v321 = vadd.f32 %v314, 1.0
    %v322 = vlog2.pop %v321
    %v323 = vmul.f32 %v322, 0.6931472
    %v324 = vmul.f32 -0.5, %v314
    %v325 = vadd.f32 %v324, 1.0
    %v326 = vmul.f32 %v325, %v314
    %v327 = vand.u32 2147483647, %v314
    %vm328 = vcmp.lt.f32.partialorder %v327, 0.0004427343
    %v329 = vsel %vm328, %v326, %v323
    %v330 = vadd.f32 %v316, 1.0
    %v331 = vlog2.pop %v330
    %v332 = vmul.f32 %v331, 0.6931472
    %v333 = vmul.f32 -0.5, %v316
    %v334 = vadd.f32 %v333, 1.0
    %v335 = vmul.f32 %v334, %v316
    %v336 = vand.u32 2147483647, %v316
    %vm337 = vcmp.lt.f32.partialorder %v336, 0.0004427343
    %v338 = vsel %vm337, %v335, %v332
    %v339 = vadd.f32 %v318, 1.0
    %v340 = vlog2.pop %v339
    %v341 = vmul.f32 %v340, 0.6931472
    %v342 = vmul.f32 -0.5, %v318
    %v343 = vadd.f32 %v342, 1.0
    %v344 = vmul.f32 %v343, %v318
    %v345 = vand.u32 2147483647, %v318
    %vm346 = vcmp.lt.f32.partialorder %v345, 0.0004427343
    %v347 = vsel %vm346, %v344, %v341
    %v348 = vadd.f32 %v320, 1.0
    %v349 = vlog2.pop %v348
    %v350 = vmul.f32 %v349, 0.6931472
    %v351 = vmul.f32 -0.5, %v320
    %v352 = vadd.f32 %v351, 1.0
    %v353 = vmul.f32 %v352, %v320
    %v354 = vand.u32 2147483647, %v320
    %vm355 = vcmp.lt.f32.partialorder %v354, 0.0004427343
    %v356 = vsel %vm355, %v353, %v350
    %v357 = vadd.f32 %v293, %v329
    %v358 = vadd.f32 %v294, %v338
    %v359 = vadd.f32 %v295, %v347
    %v360 = vadd.f32 %v296, %v356
    %v361 = vsel %vm297, %v301, %v357
    %v362 = vsel %vm298, %v302, %v358
    %v363 = vsel %vm299, %v303, %v359
    %v364 = vsel %vm300, %v304, %v360
    %365 = vst [vmem:[#allocation9] sm:$0xff] %v361
    %366 = vst [vmem:[#allocation9 + $0x8] sm:$0xff] %v362
    %367 = vst [vmem:[#allocation9 + $0x10] sm:$0xff] %v363
    %368 = vst [vmem:[#allocation9 + $0x18] sm:$0xff] %v364
    // Predicated region
    $region38: #{tpu_custom_call.1} parent=1 // pred_check
      _
    $region39: #{tpu_custom_call.1} parent=1 // pred_check_branch
      %370 = sbr.rel (0) target = $region41
    $region40: #{tpu_custom_call.1} parent=1 // pred_region
      %s372 = ssub.s32 512, 512
      %373 = vsyncadd [#allocation5], %s372
      %s374 = sshll.u32 [#allocation9], 4
      %s375 = int_to_ptr.vmem [resolvable:$true] %s374
      %380 = dma.vmem_to_hbm [thread:$0]  %s375, 512, %s5, [#allocation5], 256, 256, 16
    $region41: #{tpu_custom_call.1} parent=1 // pred_fallthru
      _
    // Predicated region
    $region42: #{tpu_custom_call.1} parent=1 // pred_check
      _
    $region43: #{tpu_custom_call.1} parent=1 // pred_check_branch
      %382 = sbr.rel (0) target = $region45
    $region44: #{tpu_custom_call.1} parent=1 // pred_region
      %383 = dma.done [#allocation5], 512
    $region45: #{tpu_custom_call.1} parent=1 // pred_fallthru
      _
    %384 = vsyncpa [#allocation4], 1
    %385 = vsyncpa [#allocation7], 1
    %386 = vsyncpa [#allocation5], 1

</llo_original>
